<compile_context>
chip_gen: v7x
topology: tpu7x:2x2x1
jax: 0.10.0
libtpu: 0.0.40
codegen_flags: <defaults>
</compile_context>

<pallas_src>
import functools

import jax
import jax.numpy as jnp
from jax import lax
from jax.experimental import pallas as pl
from jax.experimental.pallas import tpu as pltpu

HIDDEN = 64          # logical hidden width of the PyTorch module
H_PAD = 128          # hidden padded to one full lane width; ReLU(0)=0 keeps results unchanged
DEFAULT_BLOCK_B = 2048  # fits scoped VMEM on v5e/v6e/v7x, gives many grid steps at large B


def _round_up(x, m):
    return ((x + m - 1) // m) * m


def _mlp_kernel(x_ref, w1_ref, b1_ref, w2_ref, b2_ref, w3_ref, b3_ref,
                wo_ref, bo_ref, out_ref):
    """Fused 3x(Linear+ReLU) + value head for one batch tile.

    x_ref   : (block_b, F)     compute dtype (bf16 or f32)
    w*_ref  : (in, H_PAD)      compute dtype
    b*_ref  : (1, H_PAD)       f32
    wo_ref  : (1, H_PAD)       compute dtype (row form of the (H, 1) head weight)
    bo_ref  : (1, 1)           f32 scalar in SMEM
    out_ref : (1, 1, block_b)  f32 lane-dense value row for this batch tile
    """
    x = x_ref[...]
    cdt = x.dtype

    h = jnp.dot(x, w1_ref[...], preferred_element_type=jnp.float32) + b1_ref[...]
    h = jnp.maximum(h, 0.0).astype(cdt)
    h = jnp.dot(h, w2_ref[...], preferred_element_type=jnp.float32) + b2_ref[...]
    h = jnp.maximum(h, 0.0).astype(cdt)
    h = jnp.dot(h, w3_ref[...], preferred_element_type=jnp.float32) + b3_ref[...]
    h = jnp.maximum(h, 0.0)                                  # (block_b, H_PAD) f32

    # Value head (out_features == 1): VPU multiply + lane reduction instead of an
    # N=1 MXU matmul; written lane-dense.
    wo_row = wo_ref[...].astype(jnp.float32)                 # (1, H_PAD)
    v = jnp.sum(h * wo_row, axis=-1) + bo_ref[0, 0]          # (block_b,)
    out_ref[...] = v.reshape(1, 1, -1).astype(out_ref.dtype)


def _prepare_params(params, compute_dtype):
    """Zero-pad hidden 64 -> 128 and lay the head weight out as a (1, H_PAD) row."""
    H = params["w1"].shape[1]
    assert H <= H_PAD
    pad = H_PAD - H

    def pad_cols(a):        # (r, H) -> (r, H_PAD)
        return jnp.pad(a, ((0, 0), (0, pad)))

    def pad_rows_cols(a):   # (H, H) -> (H_PAD, H_PAD)
        return jnp.pad(a, ((0, pad), (0, pad)))

    return dict(
        w1=pad_cols(params["w1"]).astype(compute_dtype),
        b1=pad_cols(params["b1"]).astype(jnp.float32),
        w2=pad_rows_cols(params["w2"]).astype(compute_dtype),
        b2=pad_cols(params["b2"]).astype(jnp.float32),
        w3=pad_rows_cols(params["w3"]).astype(compute_dtype),
        b3=pad_cols(params["b3"]).astype(jnp.float32),
        wo_row=pad_cols(params["wo"].T).astype(compute_dtype),   # (1, H_PAD)
        bo=params["bo"].astype(jnp.float32),                      # (1, 1) -> SMEM
    )


def state_value_residual(x, params, *, block_b=None, compute_dtype=jnp.bfloat16):
    """Forward pass of StateValueResidual.

    x      : (B, num_features) float32
    params : logical params (PyTorch layout transposed): w1 (F,64), b1 (1,64),
             w2/w3 (64,64), b2/b3 (1,64), wo (64,1), bo (1,1)
    Returns (B, 1) float32 `value`, matching the PyTorch module.
    """
    B, F = x.shape

    # ---- batch tiling -------------------------------------------------------
    if block_b is None:
        # Explicit tile: big enough to amortize per-grid-step overhead, small enough to
        # stay well inside scoped VMEM (incl. v7x's 64 MiB) and give >= 2 grid steps
        # (megacore sharding) once B is large.
        block_b = min(DEFAULT_BLOCK_B, _round_up(B, 128))
    block_b = _round_up(block_b, 8)
    num_tiles = pl.cdiv(B, block_b)

    p = _prepare_params(params, compute_dtype)
    x_c = x.astype(compute_dtype)

    rep = lambda i: (0, 0)
    in_specs = [
        pl.BlockSpec((block_b, F), lambda i: (i, 0)),           # x tile
        pl.BlockSpec((F, H_PAD), rep),                          # w1
        pl.BlockSpec((1, H_PAD), rep),                          # b1 (f32)
        pl.BlockSpec((H_PAD, H_PAD), rep),                      # w2
        pl.BlockSpec((1, H_PAD), rep),                          # b2
        pl.BlockSpec((H_PAD, H_PAD), rep),                      # w3
        pl.BlockSpec((1, H_PAD), rep),                          # b3
        pl.BlockSpec((1, H_PAD), rep),                          # wo (row form)
        pl.BlockSpec(memory_space=pltpu.MemorySpace.SMEM),      # bo scalar
    ]
    # Lane-dense output: one (1, block_b) row per batch tile, reshaped to (B, 1) below.
    out_spec = pl.BlockSpec((1, 1, block_b), lambda i: (i, 0, 0))

    bytes_in = jnp.dtype(compute_dtype).itemsize
    vmem_limit = min(
        48 * 1024 * 1024,
        2 * block_b * F * bytes_in            # double-buffered x tiles
        + 2 * block_b * 4                     # double-buffered output rows
        + 4 * block_b * H_PAD * 4             # f32 activation working set
        + 8 * H_PAD * H_PAD * bytes_in        # weights (double-buffered)
        + (4 << 20))                          # slack

    out = pl.pallas_call(
        _mlp_kernel,
        out_shape=jax.ShapeDtypeStruct((num_tiles, 1, block_b), jnp.float32),
        grid=(num_tiles,),
        in_specs=in_specs,
        out_specs=out_spec,
        compiler_params=pltpu.CompilerParams(
            dimension_semantics=("parallel",),
            vmem_limit_bytes=int(vmem_limit)),
    )(x_c, p["w1"], p["b1"], p["w2"], p["b2"], p["w3"], p["b3"], p["wo_row"], p["bo"])

    # (num_tiles, 1, block_b) -> (B, 1); rows beyond B (tail padding) are discarded.
    return out.reshape(-1)[:B].reshape(B, 1)


def init_params(key, num_features, hidden=HIDDEN):
    """nn.Linear-style init (uniform +/- 1/sqrt(fan_in)); v_out zero-initialized
    exactly as in the PyTorch module."""
    k1, k2, k3, k4, k5, k6 = jax.random.split(key, 6)

    def lin(kw, kb, fan_in, fan_out):
        bound = 1.0 / jnp.sqrt(fan_in)
        w = jax.random.uniform(kw, (fan_in, fan_out), jnp.float32, -bound, bound)
        b = jax.random.uniform(kb, (1, fan_out), jnp.float32, -bound, bound)
        return w, b

    w1, b1 = lin(k1, k2, num_features, hidden)
    w2, b2 = lin(k3, k4, hidden, hidden)
    w3, b3 = lin(k5, k6, hidden, hidden)
    wo = jnp.zeros((hidden, 1), jnp.float32)   # v_out.weight = zeros(1, hidden)
    bo = jnp.zeros((1, 1), jnp.float32)        # v_out.bias   = zeros(1)
    return dict(w1=w1, b1=b1, w2=w2, b2=b2, w3=w3, b3=b3, wo=wo, bo=bo)


def _reference(x, p):
    dot = functools.partial(jnp.dot, precision=lax.Precision.HIGHEST)
    h = jax.nn.relu(dot(x, p["w1"]) + p["b1"])
    h = jax.nn.relu(dot(h, p["w2"]) + p["b2"])
    h = jax.nn.relu(dot(h, p["w3"]) + p["b3"])
    return dot(h, p["wo"]) + p["bo"]


if __name__ == "__main__":
    key = jax.random.PRNGKey(0)
    kx, kp, kh = jax.random.split(key, 3)

    batch = 8
    num_features = 16   # env_params['num_features']

    x = jax.random.normal(kx, (batch, num_features), jnp.float32)

    # 1) Module-faithful params: the zero-initialized head makes value == 0 exactly.
    params = init_params(kp, num_features)
    out = jax.block_until_ready(state_value_residual(x, params))
    assert out.shape == (batch, 1), out.shape
    assert jnp.allclose(out, jnp.zeros_like(out)), out

    # 2) Non-trivial head (real kernel-math check), f32 compute path, tight tolerance.
    kw, kb = jax.random.split(kh)
    params_nz = dict(params)
    params_nz["wo"] = jax.random.normal(kw, (HIDDEN, 1), jnp.float32) * 0.5
    params_nz["bo"] = jax.random.normal(kb, (1, 1), jnp.float32) * 0.5
    ref = _reference(x, params_nz)
    out_f32 = jax.block_until_ready(
        state_value_residual(x, params_nz, compute_dtype=jnp.float32))
    assert jnp.allclose(out_f32, ref, atol=1e-4, rtol=1e-4), (out_f32, ref)

    # 3) Default bf16-input / f32-accumulate fast path, loose tolerance.
    out_bf16 = jax.block_until_ready(state_value_residual(x, params_nz))
    assert jnp.allclose(out_bf16, ref, atol=5e-2, rtol=5e-2), (out_bf16, ref)

    print("KERNEL_OK")
</pallas_src>

<mosaic_0001>
module attributes {stable_mosaic.version = 11 : i64} {
  func.func @_mlp_kernel(%arg0: i32, %arg1: memref<128x16xbf16, #tpu.memory_space<vmem>>, %arg2: memref<16x128xbf16, #tpu.memory_space<vmem>>, %arg3: memref<1x128xf32, #tpu.memory_space<vmem>>, %arg4: memref<128x128xbf16, #tpu.memory_space<vmem>>, %arg5: memref<1x128xf32, #tpu.memory_space<vmem>>, %arg6: memref<128x128xbf16, #tpu.memory_space<vmem>>, %arg7: memref<1x128xf32, #tpu.memory_space<vmem>>, %arg8: memref<1x128xbf16, #tpu.memory_space<vmem>>, %arg9: memref<1x1xf32, #tpu.memory_space<smem>>, %arg10: memref<1x1x128xf32, #tpu.memory_space<vmem>>) attributes {dimension_semantics = [#tpu.dimension_semantics<parallel>], iteration_bounds = array<i64: 1>, scalar_prefetch = 0 : i64, scratch_operands = 0 : i64, tpu.core_type = #tpu.core_type<tc>, window_params = [{transform_indices = @transform_0, window_bounds = array<i64: 128, 16>}, {pipeline_mode = #tpu.pipeline_mode<synchronous>, transform_indices = @transform_1, window_bounds = array<i64: 16, 128>}, {pipeline_mode = #tpu.pipeline_mode<synchronous>, transform_indices = @transform_2, window_bounds = array<i64: 1, 128>}, {pipeline_mode = #tpu.pipeline_mode<synchronous>, transform_indices = @transform_3, window_bounds = array<i64: 128, 128>}, {pipeline_mode = #tpu.pipeline_mode<synchronous>, transform_indices = @transform_4, window_bounds = array<i64: 1, 128>}, {pipeline_mode = #tpu.pipeline_mode<synchronous>, transform_indices = @transform_5, window_bounds = array<i64: 128, 128>}, {pipeline_mode = #tpu.pipeline_mode<synchronous>, transform_indices = @transform_6, window_bounds = array<i64: 1, 128>}, {pipeline_mode = #tpu.pipeline_mode<synchronous>, transform_indices = @transform_7, window_bounds = array<i64: 1, 128>}, {transform_indices = @transform_8, window_bounds = array<i64: 1, 1>}, {transform_indices = @transform_9, window_bounds = array<i64: 1, 1, 128>}]} {
    %c0 = arith.constant 0 : index
    %c0_0 = arith.constant 0 : index
    %0 = vector.load %arg1[%c0, %c0_0] : memref<128x16xbf16, #tpu.memory_space<vmem>>, vector<128x16xbf16>
    %c0_1 = arith.constant 0 : index
    %c0_2 = arith.constant 0 : index
    %1 = vector.load %arg2[%c0_1, %c0_2] : memref<16x128xbf16, #tpu.memory_space<vmem>>, vector<16x128xbf16>
    %cst = arith.constant dense<0.000000e+00> : vector<128x128xf32>
    %2 = tpu.matmul %0, %1, %cst {dimension_numbers = #tpu.dot_dimension_numbers<[1], [0], [0], [1], [0, 0, 1, 1], [], []>} : vector<128x16xbf16>, vector<16x128xbf16>, vector<128x128xf32> -> vector<128x128xf32>
    %c0_3 = arith.constant 0 : index
    %c0_4 = arith.constant 0 : index
    %3 = vector.load %arg3[%c0_3, %c0_4] : memref<1x128xf32, #tpu.memory_space<vmem>>, vector<1x128xf32>
    %4 = vector.broadcast %3 : vector<1x128xf32> to vector<128x128xf32>
    %5 = arith.addf %2, %4 : vector<128x128xf32>
    %cst_5 = arith.constant 0.000000e+00 : f32
    %6 = vector.broadcast %cst_5 : f32 to vector<128x128xf32>
    %7 = arith.maximumf %5, %6 : vector<128x128xf32>
    %8 = arith.truncf %7 : vector<128x128xf32> to vector<128x128xbf16>
    %c0_6 = arith.constant 0 : index
    %c0_7 = arith.constant 0 : index
    %9 = vector.load %arg4[%c0_6, %c0_7] : memref<128x128xbf16, #tpu.memory_space<vmem>>, vector<128x128xbf16>
    %cst_8 = arith.constant dense<0.000000e+00> : vector<128x128xf32>
    %10 = tpu.matmul %8, %9, %cst_8 {dimension_numbers = #tpu.dot_dimension_numbers<[1], [0], [0], [1], [0, 0, 1, 1], [], []>} : vector<128x128xbf16>, vector<128x128xbf16>, vector<128x128xf32> -> vector<128x128xf32>
    %c0_9 = arith.constant 0 : index
    %c0_10 = arith.constant 0 : index
    %11 = vector.load %arg5[%c0_9, %c0_10] : memref<1x128xf32, #tpu.memory_space<vmem>>, vector<1x128xf32>
    %12 = vector.broadcast %11 : vector<1x128xf32> to vector<128x128xf32>
    %13 = arith.addf %10, %12 : vector<128x128xf32>
    %cst_11 = arith.constant 0.000000e+00 : f32
    %14 = vector.broadcast %cst_11 : f32 to vector<128x128xf32>
    %15 = arith.maximumf %13, %14 : vector<128x128xf32>
    %16 = arith.truncf %15 : vector<128x128xf32> to vector<128x128xbf16>
    %c0_12 = arith.constant 0 : index
    %c0_13 = arith.constant 0 : index
    %17 = vector.load %arg6[%c0_12, %c0_13] : memref<128x128xbf16, #tpu.memory_space<vmem>>, vector<128x128xbf16>
    %cst_14 = arith.constant dense<0.000000e+00> : vector<128x128xf32>
    %18 = tpu.matmul %16, %17, %cst_14 {dimension_numbers = #tpu.dot_dimension_numbers<[1], [0], [0], [1], [0, 0, 1, 1], [], []>} : vector<128x128xbf16>, vector<128x128xbf16>, vector<128x128xf32> -> vector<128x128xf32>
    %c0_15 = arith.constant 0 : index
    %c0_16 = arith.constant 0 : index
    %19 = vector.load %arg7[%c0_15, %c0_16] : memref<1x128xf32, #tpu.memory_space<vmem>>, vector<1x128xf32>
    %20 = vector.broadcast %19 : vector<1x128xf32> to vector<128x128xf32>
    %21 = arith.addf %18, %20 : vector<128x128xf32>
    %cst_17 = arith.constant 0.000000e+00 : f32
    %22 = vector.broadcast %cst_17 : f32 to vector<128x128xf32>
    %23 = arith.maximumf %21, %22 : vector<128x128xf32>
    %c0_18 = arith.constant 0 : index
    %c0_19 = arith.constant 0 : index
    %24 = vector.load %arg8[%c0_18, %c0_19] : memref<1x128xbf16, #tpu.memory_space<vmem>>, vector<1x128xbf16>
    %25 = arith.extf %24 : vector<1x128xbf16> to vector<1x128xf32>
    %26 = vector.broadcast %25 : vector<1x128xf32> to vector<128x128xf32>
    %27 = arith.mulf %23, %26 : vector<128x128xf32>
    %cst_20 = arith.constant dense<0.000000e+00> : vector<128xf32>
    %28 = vector.multi_reduction <add>, %27, %cst_20 [1] : vector<128x128xf32> to vector<128xf32>
    %c0_21 = arith.constant 0 : index
    %c0_22 = arith.constant 0 : index
    %29 = memref.load %arg9[%c0_21, %c0_22] : memref<1x1xf32, #tpu.memory_space<smem>>
    %30 = vector.broadcast %29 : f32 to vector<128xf32>
    %31 = arith.addf %28, %30 : vector<128xf32>
    %32 = vector.shape_cast %31 : vector<128xf32> to vector<1x1x128xf32>
    %c0_23 = arith.constant 0 : index
    %c0_24 = arith.constant 0 : index
    %c0_25 = arith.constant 0 : index
    %33 = vector.load %arg10[%c0_23, %c0_24, %c0_25] : memref<1x1x128xf32, #tpu.memory_space<vmem>>, vector<1x1x128xf32>
    tpu.vector_store %arg10[%c0_23, %c0_24, %c0_25], %32 {strides = array<i32>} : memref<1x1x128xf32, #tpu.memory_space<vmem>>, vector<1x1x128xf32>,
    return
  }
  func.func @transform_0(%arg0: i32) -> (i32, i32) {
    %c0_i32 = arith.constant 0 : i32
    %c0_i32_0 = arith.constant 0 : i32
    return %arg0, %c0_i32 : i32, i32
  }
  func.func @transform_1(%arg0: i32) -> (i32, i32) {
    %c0_i32 = arith.constant 0 : i32
    %c0_i32_0 = arith.constant 0 : i32
    %c0_i32_1 = arith.constant 0 : i32
    return %c0_i32, %c0_i32_0 : i32, i32
  }
  func.func @transform_2(%arg0: i32) -> (i32, i32) {
    %c0_i32 = arith.constant 0 : i32
    %c0_i32_0 = arith.constant 0 : i32
    %c0_i32_1 = arith.constant 0 : i32
    return %c0_i32, %c0_i32_0 : i32, i32
  }
  func.func @transform_3(%arg0: i32) -> (i32, i32) {
    %c0_i32 = arith.constant 0 : i32
    %c0_i32_0 = arith.constant 0 : i32
    %c0_i32_1 = arith.constant 0 : i32
    return %c0_i32, %c0_i32_0 : i32, i32
  }
  func.func @transform_4(%arg0: i32) -> (i32, i32) {
    %c0_i32 = arith.constant 0 : i32
    %c0_i32_0 = arith.constant 0 : i32
    %c0_i32_1 = arith.constant 0 : i32
    return %c0_i32, %c0_i32_0 : i32, i32
  }
  func.func @transform_5(%arg0: i32) -> (i32, i32) {
    %c0_i32 = arith.constant 0 : i32
    %c0_i32_0 = arith.constant 0 : i32
    %c0_i32_1 = arith.constant 0 : i32
    return %c0_i32, %c0_i32_0 : i32, i32
  }
  func.func @transform_6(%arg0: i32) -> (i32, i32) {
    %c0_i32 = arith.constant 0 : i32
    %c0_i32_0 = arith.constant 0 : i32
    %c0_i32_1 = arith.constant 0 : i32
    return %c0_i32, %c0_i32_0 : i32, i32
  }
  func.func @transform_7(%arg0: i32) -> (i32, i32) {
    %c0_i32 = arith.constant 0 : i32
    %c0_i32_0 = arith.constant 0 : i32
    %c0_i32_1 = arith.constant 0 : i32
    return %c0_i32, %c0_i32_0 : i32, i32
  }
  func.func @transform_8(%arg0: i32) -> (i32, i32) {
    %c0_i32 = arith.constant 0 : i32
    %c0_i32_0 = arith.constant 0 : i32
    %c0_i32_1 = arith.constant 0 : i32
    return %c0_i32, %c0_i32_0 : i32, i32
  }
  func.func @transform_9(%arg0: i32) -> (i32, i32, i32) {
    %c0_i32 = arith.constant 0 : i32
    %c0_i32_0 = arith.constant 0 : i32
    %c0_i32_1 = arith.constant 0 : i32
    return %arg0, %c0_i32, %c0_i32_0 : i32, i32, i32
  }
}

</mosaic_0001>

<llo_original>
// kernel: tpu_custom_call.1
$region0: #{tpu_custom_call.1}
  #allocation0 [shape = 'u32[]', space=smem, size = 0x4, offset = 0x4, fixed_abs, tag = 'smem constant byte address 0x4 - core index']
  #allocation1 [shape = 'u32[144,128]{1,0:T(1,128)}', space=vmem, size = 0x12000, scoped, tag = 'internal scratch']
  #allocation2 [shape = 'f32[1,1]{1,0:T(1,128)S(6)}', space=smem, size = 0x200, scoped, tag = 'scoped memory for tpu_custom_call.1']
  %s0 = inlined_call_operand.hbm [shape: bf16[8,16], index: 0, kind: input, shape index: {}]
  %s1 = inlined_call_operand.hbm [shape: bf16[16,128], index: 1, kind: input, shape index: {}]
  %s2 = inlined_call_operand.vmem [shape: f32[1,128], index: 2, kind: input, shape index: {}]
  %s3 = inlined_call_operand.hbm [shape: bf16[128,128], index: 3, kind: input, shape index: {}]
  %s4 = inlined_call_operand.vmem [shape: f32[1,128], index: 4, kind: input, shape index: {}]
  %s5 = inlined_call_operand.hbm [shape: bf16[128,128], index: 5, kind: input, shape index: {}]
  %s6 = inlined_call_operand.vmem [shape: f32[1,128], index: 6, kind: input, shape index: {}]
  %s7 = inlined_call_operand.vmem [shape: bf16[1,128], index: 7, kind: input, shape index: {}]
  %s8 = inlined_call_operand.<no memory space> [shape: f32[1,1], index: 8, kind: input, shape index: {}]
  %s9 = inlined_call_operand.hbm [shape: f32[1,1,128], index: 9, kind: output, shape index: {}]
  %s10 = sld [smem:[#allocation0]]
  $region62: #{tpu_custom_call.1} parent=0
    _
  %s12 = ssub.s32 1, %s10
  %s13 = scalar_select 0, %s12, %s10
  %14 = sst [smem:[#allocation2]] %s8
  $region1: #{tpu_custom_call.1} parent=0
    #allocation3 [shape = 'u8[32768]{0}', space=vmem, size = 0x8000, scoped, tag = 'input window, operand 0, single buffered']
    #allocation4 [shape = 's32[1]{0}', space=sflag, size = 0x4, scoped, tag = 'scoped memory for tpu_custom_call.1']
    #allocation5 [shape = 's32[1]{0}', space=sflag, size = 0x4, scoped, tag = 'scoped memory for tpu_custom_call.1']
    #allocation6 [shape = 'u8[4096]{0}', space=vmem, size = 0x1000, scoped, tag = 'input window, operand 1, single buffered']
    #allocation7 [shape = 's32[1]{0}', space=sflag, size = 0x4, scoped, tag = 'scoped memory for tpu_custom_call.1']
    #allocation8 [shape = 'u8[32768]{0}', space=vmem, size = 0x8000, scoped, tag = 'input window, operand 3, single buffered']
    #allocation9 [shape = 'u8[32768]{0}', space=vmem, size = 0x8000, scoped, tag = 'input window, operand 5, single buffered']
    #allocation10 [shape = 's32[1]{0}', space=sflag, size = 0x4, scoped, tag = 'scoped memory for tpu_custom_call.1']
    #allocation11 [shape = 'u8[512]{0}', space=vmem, size = 0x400, scoped, tag = 'output window, operand 0, single buffered']
    %15 = vsyncpa [#allocation4], 0
    %16 = vsyncpa [#allocation7], 0
    %17 = vsyncpa [#allocation10], 0
    %18 = vsyncpa [#allocation5], 0
    // Predicated region
    $region2: #{tpu_custom_call.1} parent=1 // pred_check
      _
    $region3: #{tpu_custom_call.1} parent=1 // pred_check_branch
      %20 = sbr.rel (0) target = $region5
    $region4: #{tpu_custom_call.1} parent=1 // pred_region
      %s22 = ssub.s32 1024, 64
      %23 = vsyncadd [#allocation4], %s22
      %s24 = sshll.u32 [#allocation3], 4
      %s25 = int_to_ptr.vmem [resolvable:$true] %s24
      %30 = dma.hbm_to_vmem [thread:$0]  %s0, 64, %s25, [#allocation4], 64, 64, 4
    $region5: #{tpu_custom_call.1} parent=1 // pred_fallthru
      _
    // Predicated region
    $region6: #{tpu_custom_call.1} parent=1 // pred_check
      _
    $region7: #{tpu_custom_call.1} parent=1 // pred_check_branch
      %32 = sbr.rel (0) target = $region9
    $region8: #{tpu_custom_call.1} parent=1 // pred_region
      %s34 = ssub.s32 128, 128
      %35 = vsyncadd [#allocation7], %s34
      %s36 = sshll.u32 [#allocation6], 4
      %s37 = int_to_ptr.vmem [resolvable:$true] %s36
      %42 = dma.hbm_to_vmem [thread:$0]  %s1, 128, %s37, [#allocation7], 64, 64, 4
    $region9: #{tpu_custom_call.1} parent=1 // pred_fallthru
      _
    // Predicated region
    $region10: #{tpu_custom_call.1} parent=1 // pred_check
      _
    $region11: #{tpu_custom_call.1} parent=1 // pred_check_branch
      %44 = sbr.rel (0) target = $region13
    $region12: #{tpu_custom_call.1} parent=1 // pred_region
      _
    $region13: #{tpu_custom_call.1} parent=1 // pred_fallthru
      _
    // Predicated region
    $region14: #{tpu_custom_call.1} parent=1 // pred_check
      _
    $region15: #{tpu_custom_call.1} parent=1 // pred_check_branch
      %46 = sbr.rel (0) target = $region17
    $region16: #{tpu_custom_call.1} parent=1 // pred_region
      %s48 = ssub.s32 1024, 1024
      %49 = vsyncadd [#allocation7], %s48
      %s50 = sshll.u32 [#allocation8], 4
      %s51 = int_to_ptr.vmem [resolvable:$true] %s50
      %56 = dma.hbm_to_vmem [thread:$0]  %s3, 1024, %s51, [#allocation7], 64, 64, 4
    $region17: #{tpu_custom_call.1} parent=1 // pred_fallthru
      _
    // Predicated region
    $region18: #{tpu_custom_call.1} parent=1 // pred_check
      _
    $region19: #{tpu_custom_call.1} parent=1 // pred_check_branch
      %58 = sbr.rel (0) target = $region21
    $region20: #{tpu_custom_call.1} parent=1 // pred_region
      _
    $region21: #{tpu_custom_call.1} parent=1 // pred_fallthru
      _
    // Predicated region
    $region22: #{tpu_custom_call.1} parent=1 // pred_check
      _
    $region23: #{tpu_custom_call.1} parent=1 // pred_check_branch
      %60 = sbr.rel (0) target = $region25
    $region24: #{tpu_custom_call.1} parent=1 // pred_region
      %s62 = ssub.s32 1024, 1024
      %63 = vsyncadd [#allocation10], %s62
      %s64 = sshll.u32 [#allocation9], 4
      %s65 = int_to_ptr.vmem [resolvable:$true] %s64
      %70 = dma.hbm_to_vmem [thread:$0]  %s5, 1024, %s65, [#allocation10], 64, 64, 4
    $region25: #{tpu_custom_call.1} parent=1 // pred_fallthru
      _
    // Predicated region
    $region26: #{tpu_custom_call.1} parent=1 // pred_check
      _
    $region27: #{tpu_custom_call.1} parent=1 // pred_check_branch
      %72 = sbr.rel (0) target = $region29
    $region28: #{tpu_custom_call.1} parent=1 // pred_region
      _
    $region29: #{tpu_custom_call.1} parent=1 // pred_fallthru
      _
    // Predicated region
    $region30: #{tpu_custom_call.1} parent=1 // pred_check
      _
    $region31: #{tpu_custom_call.1} parent=1 // pred_check_branch
      %74 = sbr.rel (0) target = $region33
    $region32: #{tpu_custom_call.1} parent=1 // pred_region
      _
    $region33: #{tpu_custom_call.1} parent=1 // pred_fallthru
      _
    // Predicated region
    $region34: #{tpu_custom_call.1} parent=1 // pred_check
      _
    $region35: #{tpu_custom_call.1} parent=1 // pred_check_branch
      %76 = sbr.rel (0) target = $region37
    $region36: #{tpu_custom_call.1} parent=1 // pred_region
      _
    $region37: #{tpu_custom_call.1} parent=1 // pred_fallthru
      _
    // Predicated region
    $region38: #{tpu_custom_call.1} parent=1 // pred_check
      _
    $region39: #{tpu_custom_call.1} parent=1 // pred_check_branch
      %78 = sbr.rel (0) target = $region41
    $region40: #{tpu_custom_call.1} parent=1 // pred_region
      %79 = dma.done [#allocation4], 1024
    $region41: #{tpu_custom_call.1} parent=1 // pred_fallthru
      _
    // Predicated region
    $region42: #{tpu_custom_call.1} parent=1 // pred_check
      _
    $region43: #{tpu_custom_call.1} parent=1 // pred_check_branch
      %81 = sbr.rel (0) target = $region45
    $region44: #{tpu_custom_call.1} parent=1 // pred_region
      %82 = dma.done [#allocation7], 128
    $region45: #{tpu_custom_call.1} parent=1 // pred_fallthru
      _
    // Predicated region
    $region46: #{tpu_custom_call.1} parent=1 // pred_check
      _
    $region47: #{tpu_custom_call.1} parent=1 // pred_check_branch
      %84 = sbr.rel (0) target = $region49
    $region48: #{tpu_custom_call.1} parent=1 // pred_region
      %85 = dma.done [#allocation7], 1024
    $region49: #{tpu_custom_call.1} parent=1 // pred_fallthru
      _
    // Predicated region
    $region50: #{tpu_custom_call.1} parent=1 // pred_check
      _
    $region51: #{tpu_custom_call.1} parent=1 // pred_check_branch
      %87 = sbr.rel (0) target = $region53
    $region52: #{tpu_custom_call.1} parent=1 // pred_region
      %88 = dma.done [#allocation10], 1024
    $region53: #{tpu_custom_call.1} parent=1 // pred_fallthru
      _
    %v90 = vld [vmem:[#allocation3] sm:$0xf]
    %v91 = vld [vmem:[#allocation3 + $0x4] sm:$0xf]
    %v92 = vld [vmem:[#allocation3 + $0x8] sm:$0xf]
    %v93 = vld [vmem:[#allocation3 + $0xc] sm:$0xf]
    %v94 = vld [vmem:[#allocation3 + $0x10] sm:$0xf]
    %v95 = vld [vmem:[#allocation3 + $0x14] sm:$0xf]
    %v96 = vld [vmem:[#allocation3 + $0x18] sm:$0xf]
    %v97 = vld [vmem:[#allocation3 + $0x1c] sm:$0xf]
    %v98 = vld [vmem:[#allocation3 + $0x20] sm:$0xf]
    %v99 = vld [vmem:[#allocation3 + $0x24] sm:$0xf]
    %v100 = vld [vmem:[#allocation3 + $0x28] sm:$0xf]
    %v101 = vld [vmem:[#allocation3 + $0x2c] sm:$0xf]
    %v102 = vld [vmem:[#allocation3 + $0x30] sm:$0xf]
    %v103 = vld [vmem:[#allocation3 + $0x34] sm:$0xf]
    %v104 = vld [vmem:[#allocation3 + $0x38] sm:$0xf]
    %v105 = vld [vmem:[#allocation3 + $0x3c] sm:$0xf]
    %v106 = vld [vmem:[#allocation6] sm:$0xf]
    %v107 = vld [vmem:[#allocation6 + $0x4] sm:$0xf]
    %v108 = vld [vmem:[%s2] sm:$0x1]
    %v110 = vlaneseq
    %v111 = vshrl.u32 %v110, 7
    %v112 = vsub.s32 0, %v111
    %v113 = vrot.slane %v108, %v112
    %v131 = vunpack.c.l.b16 %v90
    %v132 = vunpack.c.l.b16 %v91
    %v133 = vunpack.c.l.b16 %v92
    %v134 = vunpack.c.l.b16 %v93
    %v135 = vunpack.c.l.b16 %v94
    %v136 = vunpack.c.l.b16 %v95
    %v137 = vunpack.c.l.b16 %v96
    %v138 = vunpack.c.l.b16 %v97
    %v139 = vunpack.c.l.b16 %v98
    %v140 = vunpack.c.l.b16 %v99
    %v141 = vunpack.c.l.b16 %v100
    %v142 = vunpack.c.l.b16 %v101
    %v143 = vunpack.c.l.b16 %v102
    %v144 = vunpack.c.l.b16 %v103
    %v145 = vunpack.c.l.b16 %v104
    %v146 = vunpack.c.l.b16 %v105
    %v147 = vpack.c.b16 %v132, %v131
    %v148 = vpack.c.b16 %v134, %v133
    %v149 = vpack.c.b16 %v136, %v135
    %v150 = vpack.c.b16 %v138, %v137
    %v151 = vpack.c.b16 %v140, %v139
    %v152 = vpack.c.b16 %v142, %v141
    %v153 = vpack.c.b16 %v144, %v143
    %v154 = vpack.c.b16 %v146, %v145
    %v157 = vunpack.c.l.b16 %v106
    %v158 = vunpack.c.l.b16 %v107
    %v159 = vpack.c.b16 %v158, %v157
    %vm161 = vcmask 130048
    %v163 = vsel %vm161, %v147, 0
    %v166 = vsel %vm161, %v148, 0
    %v169 = vsel %vm161, %v149, 0
    %v172 = vsel %vm161, %v150, 0
    %v175 = vsel %vm161, %v151, 0
    %v178 = vsel %vm161, %v152, 0
    %v181 = vsel %vm161, %v153, 0
    %v184 = vsel %vm161, %v154, 0
    %186 = vmatprep.subr.bf16.mxu0 0
    %187 = vmatpush1.bf16.msra.mxu0 %v159
    %188 = vmatprep.subr.bf16.mxu0 0
    %189 = vmatpush1.bf16.msra.mxu0 0
    %190 = vmatprep.subr.bf16.mxu0 0
    %191 = vmatpush1.bf16.msra.mxu0 0
    %192 = vmatprep.subr.bf16.mxu0 0
    %193 = vmatpush1.bf16.msra.mxu0 0
    %194 = vmatprep.subr.bf16.mxu0 0
    %195 = vmatpush1.bf16.msra.mxu0 0
    %196 = vmatprep.subr.bf16.mxu0 0
    %197 = vmatpush1.bf16.msra.mxu0 0
    %198 = vmatprep.subr.bf16.mxu0 0
    %199 = vmatpush1.bf16.msra.mxu0 0
    %200 = vmatprep.subr.bf16.mxu0 0
    %201 = vmatpush1.bf16.msra.mxu0 0
    %202 = vmatprep.subr.bf16.mxu0 0
    %203 = vmatpush1.bf16.msra.mxu0 0
    %204 = vmatprep.subr.bf16.mxu0 0
    %205 = vmatpush1.bf16.msra.mxu0 0
    %206 = vmatprep.subr.bf16.mxu0 0
    %207 = vmatpush1.bf16.msra.mxu0 0
    %208 = vmatprep.subr.bf16.mxu0 0
    %209 = vmatpush1.bf16.msra.mxu0 0
    %210 = vmatprep.subr.bf16.mxu0 0
    %211 = vmatpush1.bf16.msra.mxu0 0
    %212 = vmatprep.subr.bf16.mxu0 0
    %213 = vmatpush1.bf16.msra.mxu0 0
    %214 = vmatprep.subr.bf16.mxu0 0
    %215 = vmatpush1.bf16.msra.mxu0 0
    %216 = vmatprep.subr.bf16.mxu0 0
    %217 = vmatpush1.bf16.msra.mxu0 0
    %218 = vmatprep.mubr.bf16.mxu0 0
    %219 = vmatmul.mubr.bf16.gmra.mrb[0].mxu0 %v163
    %v220 = vpop.f32.mrb[0].mxu0
    %v221 = vadd.f32 %v113, %v220
    %v222 = vpop.f32.mrb[0].mxu0
    %v223 = vpop.f32.mrb[0].mxu0
    %v224 = vadd.f32 %v113, %v223
    %v225 = vpop.f32.mrb[0].mxu0
    %226 = vmatprep.mubr.bf16.mxu0 0
    %227 = vmatmul.mubr.bf16.gmra.mrb[0].mxu0 %v166
    %v228 = vpop.f32.mrb[0].mxu0
    %v229 = vadd.f32 %v113, %v228
    %v230 = vpop.f32.mrb[0].mxu0
    %v231 = vpop.f32.mrb[0].mxu0
    %v232 = vadd.f32 %v113, %v231
    %v233 = vpop.f32.mrb[0].mxu0
    %234 = vmatprep.mubr.bf16.mxu0 0
    %235 = vmatmul.mubr.bf16.gmra.mrb[0].mxu0 %v169
    %v236 = vpop.f32.mrb[0].mxu0
    %v237 = vadd.f32 %v113, %v236
    %v238 = vpop.f32.mrb[0].mxu0
    %v239 = vpop.f32.mrb[0].mxu0
    %v240 = vadd.f32 %v113, %v239
    %v241 = vpop.f32.mrb[0].mxu0
    %242 = vmatprep.mubr.bf16.mxu0 0
    %243 = vmatmul.mubr.bf16.gmra.mrb[0].mxu0 %v172
    %v244 = vpop.f32.mrb[0].mxu0
    %v245 = vadd.f32 %v113, %v244
    %v246 = vpop.f32.mrb[0].mxu0
    %v247 = vpop.f32.mrb[0].mxu0
    %v248 = vadd.f32 %v113, %v247
    %v249 = vpop.f32.mrb[0].mxu0
    %250 = vmatprep.mubr.bf16.mxu0 0
    %251 = vmatmul.mubr.bf16.gmra.mrb[0].mxu0 %v175
    %v252 = vpop.f32.mrb[0].mxu0
    %v253 = vadd.f32 %v113, %v252
    %v254 = vpop.f32.mrb[0].mxu0
    %v255 = vpop.f32.mrb[0].mxu0
    %v256 = vadd.f32 %v113, %v255
    %v257 = vpop.f32.mrb[0].mxu0
    %258 = vmatprep.mubr.bf16.mxu0 0
    %259 = vmatmul.mubr.bf16.gmra.mrb[0].mxu0 %v178
    %v260 = vpop.f32.mrb[0].mxu0
    %v261 = vadd.f32 %v113, %v260
    %v262 = vpop.f32.mrb[0].mxu0
    %v263 = vpop.f32.mrb[0].mxu0
    %v264 = vadd.f32 %v113, %v263
    %v265 = vpop.f32.mrb[0].mxu0
    %266 = vmatprep.mubr.bf16.mxu0 0
    %267 = vmatmul.mubr.bf16.gmra.mrb[0].mxu0 %v181
    %v268 = vpop.f32.mrb[0].mxu0
    %v269 = vadd.f32 %v113, %v268
    %v270 = vpop.f32.mrb[0].mxu0
    %v271 = vpop.f32.mrb[0].mxu0
    %v272 = vadd.f32 %v113, %v271
    %v273 = vpop.f32.mrb[0].mxu0
    %274 = vmatprep.mubr.bf16.mxu0 0
    %275 = vmatmul.mubr.bf16.gmra.mrb[0].mxu0 %v184
    %v276 = vpop.f32.mrb[0].mxu0
    %v277 = vadd.f32 %v113, %v276
    %v278 = vpop.f32.mrb[0].mxu0
    %v279 = vpop.f32.mrb[0].mxu0
    %v280 = vadd.f32 %v113, %v279
    %v281 = vpop.f32.mrb[0].mxu0
    %282 = vdwg.mxu0
    %v283 = vmax.f32 %v221, 0.0
    %v284 = vmax.f32 %v224, 0.0
    %v285 = vmax.f32 %v229, 0.0
    %v286 = vmax.f32 %v232, 0.0
    %v287 = vmax.f32 %v237, 0.0
    %v288 = vmax.f32 %v240, 0.0
    %v289 = vmax.f32 %v245, 0.0
    %v290 = vmax.f32 %v248, 0.0
    %v291 = vmax.f32 %v253, 0.0
    %v292 = vmax.f32 %v256, 0.0
    %v293 = vmax.f32 %v261, 0.0
    %v294 = vmax.f32 %v264, 0.0
    %v295 = vmax.f32 %v269, 0.0
    %v296 = vmax.f32 %v272, 0.0
    %v297 = vmax.f32 %v277, 0.0
    %v298 = vmax.f32 %v280, 0.0
    %v299 = vpack.c.bf16 %v284, %v283
    %v300 = vpack.c.bf16 %v286, %v285
    %v301 = vpack.c.bf16 %v288, %v287
    %v302 = vpack.c.bf16 %v290, %v289
    %v303 = vpack.c.bf16 %v292, %v291
    %v304 = vpack.c.bf16 %v294, %v293
    %v305 = vpack.c.bf16 %v296, %v295
    %v306 = vpack.c.bf16 %v298, %v297
    %v307 = vld [vmem:[#allocation8] sm:$0xf]
    %v308 = vld [vmem:[#allocation8 + $0x4] sm:$0xf]
    %v309 = vld [vmem:[#allocation8 + $0x8] sm:$0xf]
    %v310 = vld [vmem:[#allocation8 + $0xc] sm:$0xf]
    %v311 = vld [vmem:[#allocation8 + $0x10] sm:$0xf]
    %v312 = vld [vmem:[#allocation8 + $0x14] sm:$0xf]
    %v313 = vld [vmem:[#allocation8 + $0x18] sm:$0xf]
    %v314 = vld [vmem:[#allocation8 + $0x1c] sm:$0xf]
    %v315 = vld [vmem:[#allocation8 + $0x20] sm:$0xf]
    %v316 = vld [vmem:[#allocation8 + $0x24] sm:$0xf]
    %v317 = vld [vmem:[#allocation8 + $0x28] sm:$0xf]
    %v318 = vld [vmem:[#allocation8 + $0x2c] sm:$0xf]
    %v319 = vld [vmem:[#allocation8 + $0x30] sm:$0xf]
    %v320 = vld [vmem:[#allocation8 + $0x34] sm:$0xf]
    %v321 = vld [vmem:[#allocation8 + $0x38] sm:$0xf]
    %v322 = vld [vmem:[#allocation8 + $0x3c] sm:$0xf]
    %v323 = vld [vmem:[%s4] sm:$0x1]
    %v325 = vlaneseq
    %v326 = vshrl.u32 %v325, 7
    %v327 = vsub.s32 0, %v326
    %v328 = vrot.slane %v323, %v327
    %v346 = vunpack.c.l.b16 %v307
    %v347 = vunpack.c.l.b16 %v308
    %v348 = vunpack.c.l.b16 %v309
    %v349 = vunpack.c.l.b16 %v310
    %v350 = vunpack.c.l.b16 %v311
    %v351 = vunpack.c.l.b16 %v312
    %v352 = vunpack.c.l.b16 %v313
    %v353 = vunpack.c.l.b16 %v314
    %v354 = vunpack.c.l.b16 %v315
    %v355 = vunpack.c.l.b16 %v316
    %v356 = vunpack.c.l.b16 %v317
    %v357 = vunpack.c.l.b16 %v318
    %v358 = vunpack.c.l.b16 %v319
    %v359 = vunpack.c.l.b16 %v320
    %v360 = vunpack.c.l.b16 %v321
    %v361 = vunpack.c.l.b16 %v322
    %v362 = vpack.c.b16 %v347, %v346
    %v363 = vpack.c.b16 %v349, %v348
    %v364 = vpack.c.b16 %v351, %v350
    %v365 = vpack.c.b16 %v353, %v352
    %v366 = vpack.c.b16 %v355, %v354
    %v367 = vpack.c.b16 %v357, %v356
    %v368 = vpack.c.b16 %v359, %v358
    %v369 = vpack.c.b16 %v361, %v360
    %378 = vmatprep.subr.bf16.mxu0 0
    %379 = vmatpush1.bf16.msra.mxu0 %v362
    %380 = vmatprep.subr.bf16.mxu0 0
    %381 = vmatpush1.bf16.msra.mxu0 %v363
    %382 = vmatprep.subr.bf16.mxu0 0
    %383 = vmatpush1.bf16.msra.mxu0 %v364
    %384 = vmatprep.subr.bf16.mxu0 0
    %385 = vmatpush1.bf16.msra.mxu0 %v365
    %386 = vmatprep.subr.bf16.mxu0 0
    %387 = vmatpush1.bf16.msra.mxu0 %v366
    %388 = vmatprep.subr.bf16.mxu0 0
    %389 = vmatpush1.bf16.msra.mxu0 %v367
    %390 = vmatprep.subr.bf16.mxu0 0
    %391 = vmatpush1.bf16.msra.mxu0 %v368
    %392 = vmatprep.subr.bf16.mxu0 0
    %393 = vmatpush1.bf16.msra.mxu0 %v369
    %394 = vmatprep.subr.bf16.mxu0 0
    %395 = vmatpush1.bf16.msra.mxu0 0
    %396 = vmatprep.subr.bf16.mxu0 0
    %397 = vmatpush1.bf16.msra.mxu0 0
    %398 = vmatprep.subr.bf16.mxu0 0
    %399 = vmatpush1.bf16.msra.mxu0 0
    %400 = vmatprep.subr.bf16.mxu0 0
    %401 = vmatpush1.bf16.msra.mxu0 0
    %402 = vmatprep.subr.bf16.mxu0 0
    %403 = vmatpush1.bf16.msra.mxu0 0
    %404 = vmatprep.subr.bf16.mxu0 0
    %405 = vmatpush1.bf16.msra.mxu0 0
    %406 = vmatprep.subr.bf16.mxu0 0
    %407 = vmatpush1.bf16.msra.mxu0 0
    %408 = vmatprep.subr.bf16.mxu0 0
    %409 = vmatpush1.bf16.msra.mxu0 0
    %410 = vmatprep.mubr.bf16.mxu0 0
    %411 = vmatmul.mubr.bf16.gmra.mrb[0].mxu0 %v299
    %v412 = vpop.f32.mrb[0].mxu0
    %v413 = vadd.f32 %v328, %v412
    %v414 = vpop.f32.mrb[0].mxu0
    %v415 = vpop.f32.mrb[0].mxu0
    %v416 = vadd.f32 %v328, %v415
    %v417 = vpop.f32.mrb[0].mxu0
    %418 = vmatprep.mubr.bf16.mxu0 0
    %419 = vmatmul.mubr.bf16.gmra.mrb[0].mxu0 %v300
    %v420 = vpop.f32.mrb[0].mxu0
    %v421 = vadd.f32 %v328, %v420
    %v422 = vpop.f32.mrb[0].mxu0
    %v423 = vpop.f32.mrb[0].mxu0
    %v424 = vadd.f32 %v328, %v423
    %v425 = vpop.f32.mrb[0].mxu0
    %426 = vmatprep.mubr.bf16.mxu0 0
    %427 = vmatmul.mubr.bf16.gmra.mrb[0].mxu0 %v301
    %v428 = vpop.f32.mrb[0].mxu0
    %v429 = vadd.f32 %v328, %v428
    %v430 = vpop.f32.mrb[0].mxu0
    %v431 = vpop.f32.mrb[0].mxu0
    %v432 = vadd.f32 %v328, %v431
    %v433 = vpop.f32.mrb[0].mxu0
    %434 = vmatprep.mubr.bf16.mxu0 0
    %435 = vmatmul.mubr.bf16.gmra.mrb[0].mxu0 %v302
    %v436 = vpop.f32.mrb[0].mxu0
    %v437 = vadd.f32 %v328, %v436
    %v438 = vpop.f32.mrb[0].mxu0
    %v439 = vpop.f32.mrb[0].mxu0
    %v440 = vadd.f32 %v328, %v439
    %v441 = vpop.f32.mrb[0].mxu0
    %442 = vmatprep.mubr.bf16.mxu0 0
    %443 = vmatmul.mubr.bf16.gmra.mrb[0].mxu0 %v303
    %v444 = vpop.f32.mrb[0].mxu0
    %v445 = vadd.f32 %v328, %v444
    %v446 = vpop.f32.mrb[0].mxu0
    %v447 = vpop.f32.mrb[0].mxu0
    %v448 = vadd.f32 %v328, %v447
    %v449 = vpop.f32.mrb[0].mxu0
    %450 = vmatprep.mubr.bf16.mxu0 0
    %451 = vmatmul.mubr.bf16.gmra.mrb[0].mxu0 %v304
    %v452 = vpop.f32.mrb[0].mxu0
    %v453 = vadd.f32 %v328, %v452
    %v454 = vpop.f32.mrb[0].mxu0
    %v455 = vpop.f32.mrb[0].mxu0
    %v456 = vadd.f32 %v328, %v455
    %v457 = vpop.f32.mrb[0].mxu0
    %458 = vmatprep.mubr.bf16.mxu0 0
    %459 = vmatmul.mubr.bf16.gmra.mrb[0].mxu0 %v305
    %v460 = vpop.f32.mrb[0].mxu0
    %v461 = vadd.f32 %v328, %v460
    %v462 = vpop.f32.mrb[0].mxu0
    %v463 = vpop.f32.mrb[0].mxu0
    %v464 = vadd.f32 %v328, %v463
    %v465 = vpop.f32.mrb[0].mxu0
    %466 = vmatprep.mubr.bf16.mxu0 0
    %467 = vmatmul.mubr.bf16.gmra.mrb[0].mxu0 %v306
    %v468 = vpop.f32.mrb[0].mxu0
    %v469 = vadd.f32 %v328, %v468
    %v470 = vpop.f32.mrb[0].mxu0
    %v471 = vpop.f32.mrb[0].mxu0
    %v472 = vadd.f32 %v328, %v471
    %v473 = vpop.f32.mrb[0].mxu0
    %474 = vdwg.mxu0
    %v475 = vmax.f32 %v413, 0.0
    %v476 = vmax.f32 %v416, 0.0
    %v477 = vmax.f32 %v421, 0.0
    %v478 = vmax.f32 %v424, 0.0
    %v479 = vmax.f32 %v429, 0.0
    %v480 = vmax.f32 %v432, 0.0
    %v481 = vmax.f32 %v437, 0.0
    %v482 = vmax.f32 %v440, 0.0
    %v483 = vmax.f32 %v445, 0.0
    %v484 = vmax.f32 %v448, 0.0
    %v485 = vmax.f32 %v453, 0.0
    %v486 = vmax.f32 %v456, 0.0
    %v487 = vmax.f32 %v461, 0.0
    %v488 = vmax.f32 %v464, 0.0
    %v489 = vmax.f32 %v469, 0.0
    %v490 = vmax.f32 %v472, 0.0
    %v491 = vpack.c.bf16 %v476, %v475
    %v492 = vpack.c.bf16 %v478, %v477
    %v493 = vpack.c.bf16 %v480, %v479
    %v494 = vpack.c.bf16 %v482, %v481
    %v495 = vpack.c.bf16 %v484, %v483
    %v496 = vpack.c.bf16 %v486, %v485
    %v497 = vpack.c.bf16 %v488, %v487
    %v498 = vpack.c.bf16 %v490, %v489
    %v499 = vld [vmem:[#allocation9] sm:$0xf]
    %v500 = vld [vmem:[#allocation9 + $0x4] sm:$0xf]
    %v501 = vld [vmem:[#allocation9 + $0x8] sm:$0xf]
    %v502 = vld [vmem:[#allocation9 + $0xc] sm:$0xf]
    %v503 = vld [vmem:[#allocation9 + $0x10] sm:$0xf]
    %v504 = vld [vmem:[#allocation9 + $0x14] sm:$0xf]
    %v505 = vld [vmem:[#allocation9 + $0x18] sm:$0xf]
    %v506 = vld [vmem:[#allocation9 + $0x1c] sm:$0xf]
    %v507 = vld [vmem:[#allocation9 + $0x20] sm:$0xf]
    %v508 = vld [vmem:[#allocation9 + $0x24] sm:$0xf]
    %v509 = vld [vmem:[#allocation9 + $0x28] sm:$0xf]
    %v510 = vld [vmem:[#allocation9 + $0x2c] sm:$0xf]
    %v511 = vld [vmem:[#allocation9 + $0x30] sm:$0xf]
    %v512 = vld [vmem:[#allocation9 + $0x34] sm:$0xf]
    %v513 = vld [vmem:[#allocation9 + $0x38] sm:$0xf]
    %v514 = vld [vmem:[#allocation9 + $0x3c] sm:$0xf]
    %v515 = vld [vmem:[%s6] sm:$0x1]
    %v517 = vlaneseq
    %v518 = vshrl.u32 %v517, 7
    %v519 = vsub.s32 0, %v518
    %v520 = vrot.slane %v515, %v519
    %v538 = vunpack.c.l.b16 %v499
    %v539 = vunpack.c.l.b16 %v500
    %v540 = vunpack.c.l.b16 %v501
    %v541 = vunpack.c.l.b16 %v502
    %v542 = vunpack.c.l.b16 %v503
    %v543 = vunpack.c.l.b16 %v504
    %v544 = vunpack.c.l.b16 %v505
    %v545 = vunpack.c.l.b16 %v506
    %v546 = vunpack.c.l.b16 %v507
    %v547 = vunpack.c.l.b16 %v508
    %v548 = vunpack.c.l.b16 %v509
    %v549 = vunpack.c.l.b16 %v510
    %v550 = vunpack.c.l.b16 %v511
    %v551 = vunpack.c.l.b16 %v512
    %v552 = vunpack.c.l.b16 %v513
    %v553 = vunpack.c.l.b16 %v514
    %v554 = vpack.c.b16 %v539, %v538
    %v555 = vpack.c.b16 %v541, %v540
    %v556 = vpack.c.b16 %v543, %v542
    %v557 = vpack.c.b16 %v545, %v544
    %v558 = vpack.c.b16 %v547, %v546
    %v559 = vpack.c.b16 %v549, %v548
    %v560 = vpack.c.b16 %v551, %v550
    %v561 = vpack.c.b16 %v553, %v552
    %570 = vmatprep.subr.bf16.mxu0 0
    %571 = vmatpush1.bf16.msra.mxu0 %v554
    %572 = vmatprep.subr.bf16.mxu0 0
    %573 = vmatpush1.bf16.msra.mxu0 %v555
    %574 = vmatprep.subr.bf16.mxu0 0
    %575 = vmatpush1.bf16.msra.mxu0 %v556
    %576 = vmatprep.subr.bf16.mxu0 0
    %577 = vmatpush1.bf16.msra.mxu0 %v557
    %578 = vmatprep.subr.bf16.mxu0 0
    %579 = vmatpush1.bf16.msra.mxu0 %v558
    %580 = vmatprep.subr.bf16.mxu0 0
    %581 = vmatpush1.bf16.msra.mxu0 %v559
    %582 = vmatprep.subr.bf16.mxu0 0
    %583 = vmatpush1.bf16.msra.mxu0 %v560
    %584 = vmatprep.subr.bf16.mxu0 0
    %585 = vmatpush1.bf16.msra.mxu0 %v561
    %586 = vmatprep.subr.bf16.mxu0 0
    %587 = vmatpush1.bf16.msra.mxu0 0
    %588 = vmatprep.subr.bf16.mxu0 0
    %589 = vmatpush1.bf16.msra.mxu0 0
    %590 = vmatprep.subr.bf16.mxu0 0
    %591 = vmatpush1.bf16.msra.mxu0 0
    %592 = vmatprep.subr.bf16.mxu0 0
    %593 = vmatpush1.bf16.msra.mxu0 0
    %594 = vmatprep.subr.bf16.mxu0 0
    %595 = vmatpush1.bf16.msra.mxu0 0
    %596 = vmatprep.subr.bf16.mxu0 0
    %597 = vmatpush1.bf16.msra.mxu0 0
    %598 = vmatprep.subr.bf16.mxu0 0
    %599 = vmatpush1.bf16.msra.mxu0 0
    %600 = vmatprep.subr.bf16.mxu0 0
    %601 = vmatpush1.bf16.msra.mxu0 0
    %602 = vmatprep.mubr.bf16.mxu0 0
    %603 = vmatmul.mubr.bf16.gmra.mrb[0].mxu0 %v491
    %v604 = vpop.f32.mrb[0].mxu0
    %v605 = vadd.f32 %v520, %v604
    %v606 = vpop.f32.mrb[0].mxu0
    %v607 = vpop.f32.mrb[0].mxu0
    %v608 = vadd.f32 %v520, %v607
    %v609 = vpop.f32.mrb[0].mxu0
    %610 = vmatprep.mubr.bf16.mxu0 0
    %611 = vmatmul.mubr.bf16.gmra.mrb[0].mxu0 %v492
    %v612 = vpop.f32.mrb[0].mxu0
    %v613 = vadd.f32 %v520, %v612
    %v614 = vpop.f32.mrb[0].mxu0
    %v615 = vpop.f32.mrb[0].mxu0
    %v616 = vadd.f32 %v520, %v615
    %v617 = vpop.f32.mrb[0].mxu0
    %618 = vmatprep.mubr.bf16.mxu0 0
    %619 = vmatmul.mubr.bf16.gmra.mrb[0].mxu0 %v493
    %v620 = vpop.f32.mrb[0].mxu0
    %v621 = vadd.f32 %v520, %v620
    %v622 = vpop.f32.mrb[0].mxu0
    %v623 = vpop.f32.mrb[0].mxu0
    %v624 = vadd.f32 %v520, %v623
    %v625 = vpop.f32.mrb[0].mxu0
    %626 = vmatprep.mubr.bf16.mxu0 0
    %627 = vmatmul.mubr.bf16.gmra.mrb[0].mxu0 %v494
    %v628 = vpop.f32.mrb[0].mxu0
    %v629 = vadd.f32 %v520, %v628
    %v630 = vpop.f32.mrb[0].mxu0
    %v631 = vpop.f32.mrb[0].mxu0
    %v632 = vadd.f32 %v520, %v631
    %v633 = vpop.f32.mrb[0].mxu0
    %634 = vmatprep.mubr.bf16.mxu0 0
    %635 = vmatmul.mubr.bf16.gmra.mrb[0].mxu0 %v495
    %v636 = vpop.f32.mrb[0].mxu0
    %v637 = vadd.f32 %v520, %v636
    %v638 = vpop.f32.mrb[0].mxu0
    %v639 = vpop.f32.mrb[0].mxu0
    %v640 = vadd.f32 %v520, %v639
    %v641 = vpop.f32.mrb[0].mxu0
    %642 = vmatprep.mubr.bf16.mxu0 0
    %643 = vmatmul.mubr.bf16.gmra.mrb[0].mxu0 %v496
    %v644 = vpop.f32.mrb[0].mxu0
    %v645 = vadd.f32 %v520, %v644
    %v646 = vpop.f32.mrb[0].mxu0
    %v647 = vpop.f32.mrb[0].mxu0
    %v648 = vadd.f32 %v520, %v647
    %v649 = vpop.f32.mrb[0].mxu0
    %650 = vmatprep.mubr.bf16.mxu0 0
    %651 = vmatmul.mubr.bf16.gmra.mrb[0].mxu0 %v497
    %v652 = vpop.f32.mrb[0].mxu0
    %v653 = vadd.f32 %v520, %v652
    %v654 = vpop.f32.mrb[0].mxu0
    %v655 = vpop.f32.mrb[0].mxu0
    %v656 = vadd.f32 %v520, %v655
    %v657 = vpop.f32.mrb[0].mxu0
    %658 = vmatprep.mubr.bf16.mxu0 0
    %659 = vmatmul.mubr.bf16.gmra.mrb[0].mxu0 %v498
    %v660 = vpop.f32.mrb[0].mxu0
    %v661 = vadd.f32 %v520, %v660
    %v662 = vpop.f32.mrb[0].mxu0
    %v663 = vpop.f32.mrb[0].mxu0
    %v664 = vadd.f32 %v520, %v663
    %v665 = vpop.f32.mrb[0].mxu0
    %666 = vdwg.mxu0
    %v667 = vmax.f32 %v605, 0.0
    %v668 = vmax.f32 %v608, 0.0
    %v669 = vmax.f32 %v613, 0.0
    %v670 = vmax.f32 %v616, 0.0
    %v671 = vmax.f32 %v621, 0.0
    %v672 = vmax.f32 %v624, 0.0
    %v673 = vmax.f32 %v629, 0.0
    %v674 = vmax.f32 %v632, 0.0
    %v675 = vmax.f32 %v637, 0.0
    %v676 = vmax.f32 %v640, 0.0
    %v677 = vmax.f32 %v645, 0.0
    %v678 = vmax.f32 %v648, 0.0
    %v679 = vmax.f32 %v653, 0.0
    %v680 = vmax.f32 %v656, 0.0
    %v681 = vmax.f32 %v661, 0.0
    %v682 = vmax.f32 %v664, 0.0
    %v683 = vld [vmem:[%s7] sm:$0x1]
    %v684 = vunpack.c.l.bf16 %v683
    %v685 = vlaneseq
    %v686 = vshrl.u32 %v685, 7
    %v687 = vsub.s32 0, %v686
    %v688 = vrot.slane %v684, %v687
    %v689 = vmul.f32 %v667, %v688
    %v690 = vmul.f32 %v668, %v688
    %v691 = vmul.f32 %v669, %v688
    %v692 = vmul.f32 %v670, %v688
    %v693 = vmul.f32 %v671, %v688
    %v694 = vmul.f32 %v672, %v688
    %v695 = vmul.f32 %v673, %v688
    %v696 = vmul.f32 %v674, %v688
    %v697 = vmul.f32 %v675, %v688
    %v698 = vmul.f32 %v676, %v688
    %v699 = vmul.f32 %v677, %v688
    %v700 = vmul.f32 %v678, %v688
    %v701 = vmul.f32 %v679, %v688
    %v702 = vmul.f32 %v680, %v688
    %v703 = vmul.f32 %v681, %v688
    %v704 = vmul.f32 %v682, %v688
    %705 = vadd.xlane.f32.xlu0 %v689
    %v706 = vpop.xlane.xlu0 %705
    %707 = vadd.xlane.f32.xlu0 %v690
    %v708 = vpop.xlane.xlu0 %707
    %709 = vadd.xlane.f32.xlu0 %v691
    %v710 = vpop.xlane.xlu0 %709
    %711 = vadd.xlane.f32.xlu0 %v692
    %v712 = vpop.xlane.xlu0 %711
    %713 = vadd.xlane.f32.xlu0 %v693
    %v714 = vpop.xlane.xlu0 %713
    %715 = vadd.xlane.f32.xlu0 %v694
    %v716 = vpop.xlane.xlu0 %715
    %717 = vadd.xlane.f32.xlu0 %v695
    %v718 = vpop.xlane.xlu0 %717
    %719 = vadd.xlane.f32.xlu0 %v696
    %v720 = vpop.xlane.xlu0 %719
    %721 = vadd.xlane.f32.xlu0 %v697
    %v722 = vpop.xlane.xlu0 %721
    %723 = vadd.xlane.f32.xlu0 %v698
    %v724 = vpop.xlane.xlu0 %723
    %725 = vadd.xlane.f32.xlu0 %v699
    %v726 = vpop.xlane.xlu0 %725
    %727 = vadd.xlane.f32.xlu0 %v700
    %v728 = vpop.xlane.xlu0 %727
    %729 = vadd.xlane.f32.xlu0 %v701
    %v730 = vpop.xlane.xlu0 %729
    %731 = vadd.xlane.f32.xlu0 %v702
    %v732 = vpop.xlane.xlu0 %731
    %733 = vadd.xlane.f32.xlu0 %v703
    %v734 = vpop.xlane.xlu0 %733
    %735 = vadd.xlane.f32.xlu0 %v704
    %v736 = vpop.xlane.xlu0 %735
    %s737 = sld [smem:[#allocation2]]
    %v738 = vstv %s737
    %v739 = vadd.f32 %v706, %v738
    %v740 = vadd.f32 %v708, %v738
    %v741 = vadd.f32 %v710, %v738
    %v742 = vadd.f32 %v712, %v738
    %v743 = vadd.f32 %v714, %v738
    %v744 = vadd.f32 %v716, %v738
    %v745 = vadd.f32 %v718, %v738
    %v746 = vadd.f32 %v720, %v738
    %v747 = vadd.f32 %v722, %v738
    %v748 = vadd.f32 %v724, %v738
    %v749 = vadd.f32 %v726, %v738
    %v750 = vadd.f32 %v728, %v738
    %v751 = vadd.f32 %v730, %v738
    %v752 = vadd.f32 %v732, %v738
    %v753 = vadd.f32 %v734, %v738
    %v754 = vadd.f32 %v736, %v738
    %v771 = vlaneseq
    %v772 = vand.u32 %v771, 127
    %v773 = vlaneseq
    %v774 = vshrl.u32 %v773, 7
    %v775 = vsub.s32 %v772, %v774
    %v776 = vrot.slane %v739, %v775
    %v777 = vadd.s32 %v772, 4294967288
    %v778 = vlaneseq
    %v779 = vshrl.u32 %v778, 7
    %v780 = vsub.s32 %v777, %v779
    %v781 = vrot.slane %v740, %v780
    %vm782 = vcmask 130112
    %v783 = vsel %vm782, %v781, %v776
    %v784 = vadd.s32 %v772, 4294967280
    %v785 = vlaneseq
    %v786 = vshrl.u32 %v785, 7
    %v787 = vsub.s32 %v784, %v786
    %v788 = vrot.slane %v741, %v787
    %vm789 = vcmask 195712
    %v790 = vsel %vm789, %v788, %v783
    %v791 = vadd.s32 %v772, 4294967272
    %v792 = vlaneseq
    %v793 = vshrl.u32 %v792, 7
    %v794 = vsub.s32 %v791, %v793
    %v795 = vrot.slane %v742, %v794
    %vm796 = vcmask 261312
    %v797 = vsel %vm796, %v795, %v790
    %v798 = vadd.s32 %v772, 4294967264
    %v799 = vlaneseq
    %v800 = vshrl.u32 %v799, 7
    %v801 = vsub.s32 %v798, %v800
    %v802 = vrot.slane %v743, %v801
    %vm803 = vcmask 326912
    %v804 = vsel %vm803, %v802, %v797
    %v805 = vadd.s32 %v772, 4294967256
    %v806 = vlaneseq
    %v807 = vshrl.u32 %v806, 7
    %v808 = vsub.s32 %v805, %v807
    %v809 = vrot.slane %v744, %v808
    %vm810 = vcmask 392512
    %v811 = vsel %vm810, %v809, %v804
    %v812 = vadd.s32 %v772, 4294967248
    %v813 = vlaneseq
    %v814 = vshrl.u32 %v813, 7
    %v815 = vsub.s32 %v812, %v814
    %v816 = vrot.slane %v745, %v815
    %vm817 = vcmask 458112
    %v818 = vsel %vm817, %v816, %v811
    %v819 = vadd.s32 %v772, 4294967240
    %v820 = vlaneseq
    %v821 = vshrl.u32 %v820, 7
    %v822 = vsub.s32 %v819, %v821
    %v823 = vrot.slane %v746, %v822
    %vm824 = vcmask 523712
    %v825 = vsel %vm824, %v823, %v818
    %v826 = vadd.s32 %v772, 4294967232
    %v827 = vlaneseq
    %v828 = vshrl.u32 %v827, 7
    %v829 = vsub.s32 %v826, %v828
    %v830 = vrot.slane %v747, %v829
    %vm831 = vcmask 589312
    %v832 = vsel %vm831, %v830, %v825
    %v833 = vadd.s32 %v772, 4294967224
    %v834 = vlaneseq
    %v835 = vshrl.u32 %v834, 7
    %v836 = vsub.s32 %v833, %v835
    %v837 = vrot.slane %v748, %v836
    %vm838 = vcmask 654912
    %v839 = vsel %vm838, %v837, %v832
    %v840 = vadd.s32 %v772, 4294967216
    %v841 = vlaneseq
    %v842 = vshrl.u32 %v841, 7
    %v843 = vsub.s32 %v840, %v842
    %v844 = vrot.slane %v749, %v843
    %vm845 = vcmask 720512
    %v846 = vsel %vm845, %v844, %v839
    %v847 = vadd.s32 %v772, 4294967208
    %v848 = vlaneseq
    %v849 = vshrl.u32 %v848, 7
    %v850 = vsub.s32 %v847, %v849
    %v851 = vrot.slane %v750, %v850
    %vm852 = vcmask 786112
    %v853 = vsel %vm852, %v851, %v846
    %v854 = vadd.s32 %v772, 4294967200
    %v855 = vlaneseq
    %v856 = vshrl.u32 %v855, 7
    %v857 = vsub.s32 %v854, %v856
    %v858 = vrot.slane %v751, %v857
    %vm859 = vcmask 851712
    %v860 = vsel %vm859, %v858, %v853
    %v861 = vadd.s32 %v772, 4294967192
    %v862 = vlaneseq
    %v863 = vshrl.u32 %v862, 7
    %v864 = vsub.s32 %v861, %v863
    %v865 = vrot.slane %v752, %v864
    %vm866 = vcmask 917312
    %v867 = vsel %vm866, %v865, %v860
    %v868 = vadd.s32 %v772, 4294967184
    %v869 = vlaneseq
    %v870 = vshrl.u32 %v869, 7
    %v871 = vsub.s32 %v868, %v870
    %v872 = vrot.slane %v753, %v871
    %vm873 = vcmask 982912
    %v874 = vsel %vm873, %v872, %v867
    %v875 = vadd.s32 %v772, 4294967176
    %v876 = vlaneseq
    %v877 = vshrl.u32 %v876, 7
    %v878 = vsub.s32 %v875, %v877
    %v879 = vrot.slane %v754, %v878
    %vm880 = vcmask 1048512
    %v881 = vsel %vm880, %v879, %v874
    %883 = vst [vmem:[#allocation11] sm:$0x1] %v881
    // Predicated region
    $region54: #{tpu_custom_call.1} parent=1 // pred_check
      _
    $region55: #{tpu_custom_call.1} parent=1 // pred_check_branch
      %885 = sbr.rel (0) target = $region57
    $region56: #{tpu_custom_call.1} parent=1 // pred_region
      %s887 = ssub.s32 16, 16
      %888 = vsyncadd [#allocation5], %s887
      %s890 = sshll.u32 [#allocation11], 4
      %s891 = int_to_ptr.vmem [resolvable:$true] %s890
      %893 = dma.vmem_to_hbm [thread:$0]  %s891, 16, %s9, [#allocation5]
    $region57: #{tpu_custom_call.1} parent=1 // pred_fallthru
      _
    // Predicated region
    $region58: #{tpu_custom_call.1} parent=1 // pred_check
      _
    $region59: #{tpu_custom_call.1} parent=1 // pred_check_branch
      %895 = sbr.rel (0) target = $region61
    $region60: #{tpu_custom_call.1} parent=1 // pred_region
      %896 = dma.done [#allocation5], 16
    $region61: #{tpu_custom_call.1} parent=1 // pred_fallthru
      _
    %897 = vsyncpa [#allocation4], 1
    %898 = vsyncpa [#allocation7], 1
    %899 = vsyncpa [#allocation10], 1
    %900 = vsyncpa [#allocation5], 1

</llo_original>
